<compile_context>
chip_gen: v6e
topology: v6e:2x2x1
jax: 0.10.0
libtpu: 0.0.40
codegen_flags: <defaults>
</compile_context>

<pallas_src>
import jax
import jax.numpy as jnp
from jax.experimental import pallas as pl
from jax.experimental.pallas import tpu as pltpu

IN_F = 8 * 8 + 1      # 65
H1 = 256
H2 = 256
OUT_F = 64

IN_PAD = 128          # lane-aligned padded input features
MAX_BLOCK_B = 512     # max batch rows per grid step


def _round_up(n, m):
    return ((n + m - 1) // m) * m


def dqn_kernel(x_ref, w1_ref, b1_ref, w2_ref, b2_ref, w3_ref, b3_ref, o_ref):
    # x / weights are bf16; all matmuls accumulate in f32 on the MXU.
    x = x_ref[...]

    h = jnp.dot(x, w1_ref[...], preferred_element_type=jnp.float32) + b1_ref[...]
    h = jnp.maximum(h, 0.0).astype(jnp.bfloat16)

    h = jnp.dot(h, w2_ref[...], preferred_element_type=jnp.float32) + b2_ref[...]
    h = jnp.maximum(h, 0.0).astype(jnp.bfloat16)

    o_ref[...] = (
        jnp.dot(h, w3_ref[...], preferred_element_type=jnp.float32) + b3_ref[...]
    )


def prepare_params(params):
    """One-time pad + cast of the weights (call once; reuse every forward).

    Hoisting this out of dqn_forward removes ~6 XLA pad/convert ops (and the
    associated HBM round-trips over ~400 KB of weights) from every call.
    """
    w1, b1, w2, b2, w3, b3 = params
    w1_p = jnp.pad(w1, ((0, IN_PAD - IN_F), (0, 0))).astype(jnp.bfloat16)  # (128, 256)
    w2_p = w2.astype(jnp.bfloat16)                                         # (256, 256)
    w3_p = w3.astype(jnp.bfloat16)                                         # (256, 64)
    b1_p = b1.astype(jnp.float32).reshape(1, H1)
    b2_p = b2.astype(jnp.float32).reshape(1, H2)
    b3_p = b3.astype(jnp.float32).reshape(1, OUT_F)
    return (w1_p, b1_p, w2_p, b2_p, w3_p, b3_p)


def dqn_forward(x, padded_params):
    """x: (B, 65) float -> (B, 64) float32 (matches PyTorch DQN.forward)."""
    w1_p, b1_p, w2_p, b2_p, w3_p, b3_p = padded_params
    B = x.shape[0]

    # Grid sizing: at least 2 parallel steps (dual-TC v7x) once B is big enough
    # for two >=8-row tiles; bb chosen to minimize batch padding.
    n_steps = max(pl.cdiv(B, MAX_BLOCK_B), 2 if B >= 16 else 1)
    bb = _round_up(pl.cdiv(B, n_steps), 8)
    b_pad = n_steps * bb

    # Single cheap pass over x: cast directly to bf16 and pad to lane-dense
    # (b_pad, 128).  Padded feature lanes hit the zero rows of w1_p, padded
    # batch rows are sliced off below.
    x_p = jnp.pad(x.astype(jnp.bfloat16),
                  ((0, b_pad - B), (0, IN_PAD - IN_F)))

    flops = 2 * b_pad * (IN_PAD * H1 + H1 * H2 + H2 * OUT_F)
    bytes_accessed = (
        x_p.size * 2 + w1_p.size * 2 + w2_p.size * 2 + w3_p.size * 2
        + b1_p.size * 4 + b2_p.size * 4 + b3_p.size * 4
        + b_pad * OUT_F * 4
    )

    out = pl.pallas_call(
        dqn_kernel,
        out_shape=jax.ShapeDtypeStruct((b_pad, OUT_F), jnp.float32),
        grid=(n_steps,),
        in_specs=[
            pl.BlockSpec((bb, IN_PAD), lambda i: (i, 0)),     # x tile (per step)
            pl.BlockSpec((IN_PAD, H1), lambda i: (0, 0)),     # w1 (VMEM-resident)
            pl.BlockSpec((1, H1), lambda i: (0, 0)),          # b1
            pl.BlockSpec((H1, H2), lambda i: (0, 0)),         # w2
            pl.BlockSpec((1, H2), lambda i: (0, 0)),          # b2
            pl.BlockSpec((H2, OUT_F), lambda i: (0, 0)),      # w3
            pl.BlockSpec((1, OUT_F), lambda i: (0, 0)),       # b3
        ],
        out_specs=pl.BlockSpec((bb, OUT_F), lambda i: (i, 0)),
        compiler_params=pltpu.CompilerParams(
            dimension_semantics=("parallel",)),
        cost_estimate=pl.CostEstimate(
            flops=flops, transcendentals=0, bytes_accessed=bytes_accessed),
    )(x_p, w1_p, b1_p, w2_p, b2_p, w3_p, b3_p)

    return out[:B]


def init_params(key):
    """Deterministic init mimicking PyTorch's default Linear init
    (uniform in +/- 1/sqrt(fan_in)).  Weights stored as (in, out), f32."""
    def linear(key, fan_in, fan_out):
        kw, kb = jax.random.split(key)
        bound = 1.0 / jnp.sqrt(jnp.float32(fan_in))
        w = jax.random.uniform(kw, (fan_in, fan_out), jnp.float32, -bound, bound)
        b = jax.random.uniform(kb, (1, fan_out), jnp.float32, -bound, bound)
        return w, b

    k1, k2, k3 = jax.random.split(key, 3)
    w1, b1 = linear(k1, IN_F, H1)
    w2, b2 = linear(k2, H1, H2)
    w3, b3 = linear(k3, H2, OUT_F)
    return (w1, b1, w2, b2, w3, b3)


def _reference(x, params):
    """Plain-JAX reference with the same bf16-operand / f32-accumulate math."""
    w1, b1, w2, b2, w3, b3 = params
    xb = x.astype(jnp.bfloat16)
    h = jnp.dot(xb, w1.astype(jnp.bfloat16),
                preferred_element_type=jnp.float32) + b1
    h = jnp.maximum(h, 0.0).astype(jnp.bfloat16)
    h = jnp.dot(h, w2.astype(jnp.bfloat16),
                preferred_element_type=jnp.float32) + b2
    h = jnp.maximum(h, 0.0).astype(jnp.bfloat16)
    return jnp.dot(h, w3.astype(jnp.bfloat16),
                   preferred_element_type=jnp.float32) + b3


if __name__ == "__main__":
    key = jax.random.PRNGKey(0)
    k_params, k_x = jax.random.split(key)

    params = init_params(k_params)
    padded_params = prepare_params(params)   # one-time pad/cast (hoisted)

    fwd = jax.jit(dqn_forward)

    # Small batch of Reversi states: 8x8 board flattened + 1 player flag = 65
    # features.  B=37 exercises row padding (-> two 24-row tiles, b_pad=48),
    # the >=2-step parallel grid, and the 65 -> 128 feature padding path.
    B = 37
    x = jax.random.normal(k_x, (B, IN_F), dtype=jnp.float32)

    out = fwd(x, padded_params)
    out = jax.block_until_ready(out)

    ref = _reference(x, params)
    assert out.shape == (B, OUT_F)
    assert jnp.allclose(out, ref, atol=1e-2, rtol=1e-2), (
        float(jnp.max(jnp.abs(out - ref))))

    print("KERNEL_OK")
</pallas_src>

<mosaic_0001>
module attributes {stable_mosaic.version = 11 : i64} {
  func.func @dqn_kernel(%arg0: i32, %arg1: memref<24x128xbf16, #tpu.memory_space<vmem>>, %arg2: memref<128x256xbf16, #tpu.memory_space<vmem>>, %arg3: memref<1x256xf32, #tpu.memory_space<vmem>>, %arg4: memref<256x256xbf16, #tpu.memory_space<vmem>>, %arg5: memref<1x256xf32, #tpu.memory_space<vmem>>, %arg6: memref<256x64xbf16, #tpu.memory_space<vmem>>, %arg7: memref<1x64xf32, #tpu.memory_space<vmem>>, %arg8: memref<24x64xf32, #tpu.memory_space<vmem>>) attributes {dimension_semantics = [#tpu.dimension_semantics<parallel>], iteration_bounds = array<i64: 2>, scalar_prefetch = 0 : i64, scratch_operands = 0 : i64, tpu.core_type = #tpu.core_type<tc>, window_params = [{transform_indices = @transform_0, window_bounds = array<i64: 24, 128>}, {pipeline_mode = #tpu.pipeline_mode<synchronous>, transform_indices = @transform_1, window_bounds = array<i64: 128, 256>}, {pipeline_mode = #tpu.pipeline_mode<synchronous>, transform_indices = @transform_2, window_bounds = array<i64: 1, 256>}, {pipeline_mode = #tpu.pipeline_mode<synchronous>, transform_indices = @transform_3, window_bounds = array<i64: 256, 256>}, {pipeline_mode = #tpu.pipeline_mode<synchronous>, transform_indices = @transform_4, window_bounds = array<i64: 1, 256>}, {pipeline_mode = #tpu.pipeline_mode<synchronous>, transform_indices = @transform_5, window_bounds = array<i64: 256, 64>}, {pipeline_mode = #tpu.pipeline_mode<synchronous>, transform_indices = @transform_6, window_bounds = array<i64: 1, 64>}, {transform_indices = @transform_7, window_bounds = array<i64: 24, 64>}]} {
    %c0 = arith.constant 0 : index
    %c0_0 = arith.constant 0 : index
    %0 = vector.load %arg1[%c0, %c0_0] : memref<24x128xbf16, #tpu.memory_space<vmem>>, vector<24x128xbf16>
    %c0_1 = arith.constant 0 : index
    %c0_2 = arith.constant 0 : index
    %1 = vector.load %arg2[%c0_1, %c0_2] : memref<128x256xbf16, #tpu.memory_space<vmem>>, vector<128x256xbf16>
    %cst = arith.constant dense<0.000000e+00> : vector<24x256xf32>
    %2 = tpu.matmul %0, %1, %cst {dimension_numbers = #tpu.dot_dimension_numbers<[1], [0], [0], [1], [0, 0, 1, 1], [], []>} : vector<24x128xbf16>, vector<128x256xbf16>, vector<24x256xf32> -> vector<24x256xf32>
    %c0_3 = arith.constant 0 : index
    %c0_4 = arith.constant 0 : index
    %3 = vector.load %arg3[%c0_3, %c0_4] : memref<1x256xf32, #tpu.memory_space<vmem>>, vector<1x256xf32>
    %4 = vector.broadcast %3 : vector<1x256xf32> to vector<24x256xf32>
    %5 = arith.addf %2, %4 : vector<24x256xf32>
    %cst_5 = arith.constant 0.000000e+00 : f32
    %6 = vector.broadcast %cst_5 : f32 to vector<24x256xf32>
    %7 = arith.maximumf %5, %6 : vector<24x256xf32>
    %8 = arith.truncf %7 : vector<24x256xf32> to vector<24x256xbf16>
    %c0_6 = arith.constant 0 : index
    %c0_7 = arith.constant 0 : index
    %9 = vector.load %arg4[%c0_6, %c0_7] : memref<256x256xbf16, #tpu.memory_space<vmem>>, vector<256x256xbf16>
    %cst_8 = arith.constant dense<0.000000e+00> : vector<24x256xf32>
    %10 = tpu.matmul %8, %9, %cst_8 {dimension_numbers = #tpu.dot_dimension_numbers<[1], [0], [0], [1], [0, 0, 1, 1], [], []>} : vector<24x256xbf16>, vector<256x256xbf16>, vector<24x256xf32> -> vector<24x256xf32>
    %c0_9 = arith.constant 0 : index
    %c0_10 = arith.constant 0 : index
    %11 = vector.load %arg5[%c0_9, %c0_10] : memref<1x256xf32, #tpu.memory_space<vmem>>, vector<1x256xf32>
    %12 = vector.broadcast %11 : vector<1x256xf32> to vector<24x256xf32>
    %13 = arith.addf %10, %12 : vector<24x256xf32>
    %cst_11 = arith.constant 0.000000e+00 : f32
    %14 = vector.broadcast %cst_11 : f32 to vector<24x256xf32>
    %15 = arith.maximumf %13, %14 : vector<24x256xf32>
    %16 = arith.truncf %15 : vector<24x256xf32> to vector<24x256xbf16>
    %c0_12 = arith.constant 0 : index
    %c0_13 = arith.constant 0 : index
    %17 = vector.load %arg6[%c0_12, %c0_13] : memref<256x64xbf16, #tpu.memory_space<vmem>>, vector<256x64xbf16>
    %cst_14 = arith.constant dense<0.000000e+00> : vector<24x64xf32>
    %18 = tpu.matmul %16, %17, %cst_14 {dimension_numbers = #tpu.dot_dimension_numbers<[1], [0], [0], [1], [0, 0, 1, 1], [], []>} : vector<24x256xbf16>, vector<256x64xbf16>, vector<24x64xf32> -> vector<24x64xf32>
    %c0_15 = arith.constant 0 : index
    %c0_16 = arith.constant 0 : index
    %19 = vector.load %arg7[%c0_15, %c0_16] : memref<1x64xf32, #tpu.memory_space<vmem>>, vector<1x64xf32>
    %20 = vector.broadcast %19 : vector<1x64xf32> to vector<24x64xf32>
    %21 = arith.addf %18, %20 : vector<24x64xf32>
    %c0_17 = arith.constant 0 : index
    %c0_18 = arith.constant 0 : index
    %22 = vector.load %arg8[%c0_17, %c0_18] : memref<24x64xf32, #tpu.memory_space<vmem>>, vector<24x64xf32>
    tpu.vector_store %arg8[%c0_17, %c0_18], %21 {strides = array<i32>} : memref<24x64xf32, #tpu.memory_space<vmem>>, vector<24x64xf32>,
    return
  }
  func.func @transform_0(%arg0: i32) -> (i32, i32) {
    %c0_i32 = arith.constant 0 : i32
    %c0_i32_0 = arith.constant 0 : i32
    return %arg0, %c0_i32 : i32, i32
  }
  func.func @transform_1(%arg0: i32) -> (i32, i32) {
    %c0_i32 = arith.constant 0 : i32
    %c0_i32_0 = arith.constant 0 : i32
    %c0_i32_1 = arith.constant 0 : i32
    return %c0_i32, %c0_i32_0 : i32, i32
  }
  func.func @transform_2(%arg0: i32) -> (i32, i32) {
    %c0_i32 = arith.constant 0 : i32
    %c0_i32_0 = arith.constant 0 : i32
    %c0_i32_1 = arith.constant 0 : i32
    return %c0_i32, %c0_i32_0 : i32, i32
  }
  func.func @transform_3(%arg0: i32) -> (i32, i32) {
    %c0_i32 = arith.constant 0 : i32
    %c0_i32_0 = arith.constant 0 : i32
    %c0_i32_1 = arith.constant 0 : i32
    return %c0_i32, %c0_i32_0 : i32, i32
  }
  func.func @transform_4(%arg0: i32) -> (i32, i32) {
    %c0_i32 = arith.constant 0 : i32
    %c0_i32_0 = arith.constant 0 : i32
    %c0_i32_1 = arith.constant 0 : i32
    return %c0_i32, %c0_i32_0 : i32, i32
  }
  func.func @transform_5(%arg0: i32) -> (i32, i32) {
    %c0_i32 = arith.constant 0 : i32
    %c0_i32_0 = arith.constant 0 : i32
    %c0_i32_1 = arith.constant 0 : i32
    return %c0_i32, %c0_i32_0 : i32, i32
  }
  func.func @transform_6(%arg0: i32) -> (i32, i32) {
    %c0_i32 = arith.constant 0 : i32
    %c0_i32_0 = arith.constant 0 : i32
    %c0_i32_1 = arith.constant 0 : i32
    return %c0_i32, %c0_i32_0 : i32, i32
  }
  func.func @transform_7(%arg0: i32) -> (i32, i32) {
    %c0_i32 = arith.constant 0 : i32
    %c0_i32_0 = arith.constant 0 : i32
    return %arg0, %c0_i32 : i32, i32
  }
}

</mosaic_0001>

<llo_original>
// kernel: dqn_forward.1
$region0: #{dqn_forward.1}
  #allocation0 [shape = 'u32[]', space=smem, size = 0x4, offset = 0x4, fixed_abs, tag = 'smem constant byte address 0x4 - core index']
  #allocation1 [shape = 'u32[144,128]{1,0:T(1,128)}', space=vmem, size = 0x12000, scoped, tag = 'internal scratch']
  %s0 = inlined_call_operand.vmem [shape: bf16[48,128], index: 0, kind: input, shape index: {}]
  %s1 = inlined_call_operand.hbm [shape: bf16[128,256], index: 1, kind: input, shape index: {}]
  %s2 = inlined_call_operand.vmem [shape: f32[1,256], index: 2, kind: input, shape index: {}]
  %s3 = inlined_call_operand.vmem [shape: bf16[256,256], index: 3, kind: input, shape index: {}]
  %s4 = inlined_call_operand.vmem [shape: f32[1,256], index: 4, kind: input, shape index: {}]
  %s5 = inlined_call_operand.vmem [shape: bf16[256,64], index: 5, kind: input, shape index: {}]
  %s6 = inlined_call_operand.vmem [shape: f32[1,64], index: 6, kind: input, shape index: {}]
  %s7 = inlined_call_operand.vmem [shape: f32[48,64], index: 7, kind: output, shape index: {}]
  %s8 = sld [smem:[#allocation0]]
  $region65: #{dqn_forward.1} parent=0
    _
  %s10 = ssub.s32 1, %s8
  %s11 = scalar_select 0, %s10, %s8
  $region1: #{dqn_forward.1} parent=0
    #allocation2 [shape = 'u8[65536]{0}', space=vmem, size = 0x10000, scoped, tag = 'input window, operand 1, single buffered']
    #allocation3 [shape = 's32[2]{0}', space=sflag, size = 0x8, scoped, tag = 'scoped memory for dqn_forward.1']
    %12 = vsyncpa [#allocation3], 0
    loop: start=0, step=1, limit=4
    $region2: #{dqn_forward.1} parent=1 // loop_pre_header
      _
    $region3: #{dqn_forward.1} parent=1 // loop_header
      %s14 = sphi 0, %s18
      %p15 = scmp.ge.s32.totalorder %s14, 4
      %s24 = sphi 0, %s26
      %s27 = sphi 0, %s24
      %s28 = sphi 0, %s27
      %s44 = sphi 0, %s28
      %s48 = sphi 0, %s48
      %s50 = sphi 0, %s48
      %s51 = sphi 0, %s50
      %s65 = sphi 0, %s51
      %s69 = sphi 0, %s69
      %s71 = sphi 0, %s69
      %s72 = sphi 0, %s71
      %s86 = sphi 0, %s72
      %s90 = sphi 0, %s90
      %s92 = sphi 0, %s90
      %s93 = sphi 0, %s92
      %s107 = sphi 0, %s93
      %s111 = sphi 0, %s111
      %s113 = sphi 0, %s111
      %s114 = sphi 0, %s113
      %s128 = sphi 0, %s114
      %s132 = sphi 0, %s132
      %s134 = sphi 0, %s132
      %s135 = sphi 0, %s134
      %s149 = sphi 0, %s135
      %s153 = sphi 0, %s153
      %s155 = sphi 0, %s153
      %s156 = sphi 0, %s155
      %s170 = sphi 0, %s156
      %s176 = sphi 0, %s178
      %s179 = sphi 0, %s176
      %s180 = sphi 0, %s179
      %s196 = sphi 0, %s180
    $region4: #{dqn_forward.1} parent=1 // loop_header_branch
      %17 = sbr.rel (%p15) target = $region8
    $region5: #{dqn_forward.1} parent=1 // loop_body
      %s19 = ssub.s32 %s14, 1
      %s20 = ssub.s32 %s14, 2
      %s21 = sadd.s32 %s14, 1
      %s22 = ssub.s32 %s14, %s21
      %p23 = scmp.eq.s32.totalorder %s22, 0
      %s25 = sadd.s32 %s24, 1
      %s26 = scalar_select %p23, %s24, %s25
      %p29 = pneg %p23
      %p30 = scmp.eq.s32.totalorder %s14, 1
      %p31 = por %p29, %p30
      %p32 = scmp.ne.s32.totalorder %s24, %s27
      %p33 = scmp.eq.s32.totalorder %s14, 0
      %p34 = por %p32, %p33
      %p35 = scmp.ne.s32.totalorder %s24, %s27
      %p36 = scmp.eq.s32.totalorder %s19, 1
      %p37 = por %p35, %p36
      %p38 = scmp.ne.s32.totalorder %s27, %s28
      %p39 = scmp.eq.s32.totalorder %s19, 0
      %p40 = por %p38, %p39
      %p41 = scmp.ne.s32.totalorder %s27, %s28
      %p42 = scmp.eq.s32.totalorder %s20, 1
      %p43 = por %p41, %p42
      %p45 = scmp.ne.s32.totalorder %s28, %s44
      %p46 = scmp.eq.s32.totalorder %s20, 0
      %p47 = por %p45, %p46
      %s49 = sadd.s32 %s48, 1
      %p52 = scmp.eq.s32.totalorder %s14, 1
      %p53 = scmp.ne.s32.totalorder %s48, %s50
      %p54 = scmp.eq.s32.totalorder %s14, 0
      %p55 = por %p53, %p54
      %p56 = scmp.ne.s32.totalorder %s48, %s50
      %p57 = scmp.eq.s32.totalorder %s19, 1
      %p58 = por %p56, %p57
      %p59 = scmp.ne.s32.totalorder %s50, %s51
      %p60 = scmp.eq.s32.totalorder %s19, 0
      %p61 = por %p59, %p60
      %p62 = scmp.ne.s32.totalorder %s50, %s51
      %p63 = scmp.eq.s32.totalorder %s20, 1
      %p64 = por %p62, %p63
      %p66 = scmp.ne.s32.totalorder %s51, %s65
      %p67 = scmp.eq.s32.totalorder %s20, 0
      %p68 = por %p66, %p67
      %s70 = sadd.s32 %s69, 1
      %p73 = scmp.eq.s32.totalorder %s14, 1
      %p74 = scmp.ne.s32.totalorder %s69, %s71
      %p75 = scmp.eq.s32.totalorder %s14, 0
      %p76 = por %p74, %p75
      %p77 = scmp.ne.s32.totalorder %s69, %s71
      %p78 = scmp.eq.s32.totalorder %s19, 1
      %p79 = por %p77, %p78
      %p80 = scmp.ne.s32.totalorder %s71, %s72
      %p81 = scmp.eq.s32.totalorder %s19, 0
      %p82 = por %p80, %p81
      %p83 = scmp.ne.s32.totalorder %s71, %s72
      %p84 = scmp.eq.s32.totalorder %s20, 1
      %p85 = por %p83, %p84
      %p87 = scmp.ne.s32.totalorder %s72, %s86
      %p88 = scmp.eq.s32.totalorder %s20, 0
      %p89 = por %p87, %p88
      %s91 = sadd.s32 %s90, 1
      %p94 = scmp.eq.s32.totalorder %s14, 1
      %p95 = scmp.ne.s32.totalorder %s90, %s92
      %p96 = scmp.eq.s32.totalorder %s14, 0
      %p97 = por %p95, %p96
      %p98 = scmp.ne.s32.totalorder %s90, %s92
      %p99 = scmp.eq.s32.totalorder %s19, 1
      %p100 = por %p98, %p99
      %p101 = scmp.ne.s32.totalorder %s92, %s93
      %p102 = scmp.eq.s32.totalorder %s19, 0
      %p103 = por %p101, %p102
      %p104 = scmp.ne.s32.totalorder %s92, %s93
      %p105 = scmp.eq.s32.totalorder %s20, 1
      %p106 = por %p104, %p105
      %p108 = scmp.ne.s32.totalorder %s93, %s107
      %p109 = scmp.eq.s32.totalorder %s20, 0
      %p110 = por %p108, %p109
      %s112 = sadd.s32 %s111, 1
      %p115 = scmp.eq.s32.totalorder %s14, 1
      %p116 = scmp.ne.s32.totalorder %s111, %s113
      %p117 = scmp.eq.s32.totalorder %s14, 0
      %p118 = por %p116, %p117
      %p119 = scmp.ne.s32.totalorder %s111, %s113
      %p120 = scmp.eq.s32.totalorder %s19, 1
      %p121 = por %p119, %p120
      %p122 = scmp.ne.s32.totalorder %s113, %s114
      %p123 = scmp.eq.s32.totalorder %s19, 0
      %p124 = por %p122, %p123
      %p125 = scmp.ne.s32.totalorder %s113, %s114
      %p126 = scmp.eq.s32.totalorder %s20, 1
      %p127 = por %p125, %p126
      %p129 = scmp.ne.s32.totalorder %s114, %s128
      %p130 = scmp.eq.s32.totalorder %s20, 0
      %p131 = por %p129, %p130
      %s133 = sadd.s32 %s132, 1
      %p136 = scmp.eq.s32.totalorder %s14, 1
      %p137 = scmp.ne.s32.totalorder %s132, %s134
      %p138 = scmp.eq.s32.totalorder %s14, 0
      %p139 = por %p137, %p138
      %p140 = scmp.ne.s32.totalorder %s132, %s134
      %p141 = scmp.eq.s32.totalorder %s19, 1
      %p142 = por %p140, %p141
      %p143 = scmp.ne.s32.totalorder %s134, %s135
      %p144 = scmp.eq.s32.totalorder %s19, 0
      %p145 = por %p143, %p144
      %p146 = scmp.ne.s32.totalorder %s134, %s135
      %p147 = scmp.eq.s32.totalorder %s20, 1
      %p148 = por %p146, %p147
      %p150 = scmp.ne.s32.totalorder %s135, %s149
      %p151 = scmp.eq.s32.totalorder %s20, 0
      %p152 = por %p150, %p151
      %s154 = sadd.s32 %s153, 1
      %p157 = scmp.eq.s32.totalorder %s14, 1
      %p158 = scmp.ne.s32.totalorder %s153, %s155
      %p159 = scmp.eq.s32.totalorder %s14, 0
      %p160 = por %p158, %p159
      %p161 = scmp.ne.s32.totalorder %s153, %s155
      %p162 = scmp.eq.s32.totalorder %s19, 1
      %p163 = por %p161, %p162
      %p164 = scmp.ne.s32.totalorder %s155, %s156
      %p165 = scmp.eq.s32.totalorder %s19, 0
      %p166 = por %p164, %p165
      %p167 = scmp.ne.s32.totalorder %s155, %s156
      %p168 = scmp.eq.s32.totalorder %s20, 1
      %p169 = por %p167, %p168
      %p171 = scmp.ne.s32.totalorder %s156, %s170
      %p172 = scmp.eq.s32.totalorder %s20, 0
      %p173 = por %p171, %p172
      %s174 = ssub.s32 %s14, %s21
      %p175 = scmp.eq.s32.totalorder %s174, 0
      %s177 = sadd.s32 %s176, 1
      %s178 = scalar_select %p175, %s176, %s177
      %p181 = pneg %p175
      %p182 = scmp.eq.s32.totalorder %s14, 1
      %p183 = por %p181, %p182
      %p184 = scmp.ne.s32.totalorder %s176, %s179
      %p185 = scmp.eq.s32.totalorder %s14, 0
      %p186 = por %p184, %p185
      %p187 = scmp.ne.s32.totalorder %s176, %s179
      %p188 = scmp.eq.s32.totalorder %s19, 1
      %p189 = por %p187, %p188
      %p190 = scmp.ne.s32.totalorder %s179, %s180
      %p191 = scmp.eq.s32.totalorder %s19, 0
      %p192 = por %p190, %p191
      %p193 = scmp.ne.s32.totalorder %s179, %s180
      %p194 = scmp.eq.s32.totalorder %s20, 1
      %p195 = por %p193, %p194
      %p197 = scmp.ne.s32.totalorder %s180, %s196
      %p198 = scmp.eq.s32.totalorder %s20, 0
      %p199 = por %p197, %p198
      %p200 = scmp.le.s32.totalorder 1, %s14
      %p201 = scmp.lt.s32.totalorder %s14, 3
      %p202 = pnand %p200, %p201
      %p203 = pneg %p202
      // Predicated region
      $region9: #{dqn_forward.1} parent=5 // pred_check
        _
      $region10: #{dqn_forward.1} parent=5 // pred_check_branch
        %205 = sbr.rel (%p202) target = $region12
      $region11: #{dqn_forward.1} parent=5 // pred_region
        %s206 = ssub.s32 %s14, 1
        // Predicated region
        $region13: #{dqn_forward.1} parent=11 // pred_check
          %p207 = pneg %p61
        $region14: #{dqn_forward.1} parent=11 // pred_check_branch
          %209 = sbr.rel (%p207) target = $region16
        $region15: #{dqn_forward.1} parent=11 // pred_region
          %s211 = ssub.s32 2048, 2048
          %212 = vsyncadd [#allocation3], %s211
          %s213 = sshll.u32 [#allocation2], 4
          %s214 = int_to_ptr.vmem [resolvable:$true] %s213
          %219 = dma.hbm_to_vmem [thread:$0]  %s1, 2048, %s214, [#allocation3], 128, 128, 8
        $region16: #{dqn_forward.1} parent=11 // pred_fallthru
          _
        // Predicated region
        $region17: #{dqn_forward.1} parent=11 // pred_check
          %p220 = pneg %p82
        $region18: #{dqn_forward.1} parent=11 // pred_check_branch
          %222 = sbr.rel (%p220) target = $region20
        $region19: #{dqn_forward.1} parent=11 // pred_region
          _
        $region20: #{dqn_forward.1} parent=11 // pred_fallthru
          _
        // Predicated region
        $region21: #{dqn_forward.1} parent=11 // pred_check
          %p223 = pneg %p103
        $region22: #{dqn_forward.1} parent=11 // pred_check_branch
          %225 = sbr.rel (%p223) target = $region24
        $region23: #{dqn_forward.1} parent=11 // pred_region
          _
        $region24: #{dqn_forward.1} parent=11 // pred_fallthru
          _
        // Predicated region
        $region25: #{dqn_forward.1} parent=11 // pred_check
          %p226 = pneg %p124
        $region26: #{dqn_forward.1} parent=11 // pred_check_branch
          %228 = sbr.rel (%p226) target = $region28
        $region27: #{dqn_forward.1} parent=11 // pred_region
          _
        $region28: #{dqn_forward.1} parent=11 // pred_fallthru
          _
        // Predicated region
        $region29: #{dqn_forward.1} parent=11 // pred_check
          %p229 = pneg %p145
        $region30: #{dqn_forward.1} parent=11 // pred_check_branch
          %231 = sbr.rel (%p229) target = $region32
        $region31: #{dqn_forward.1} parent=11 // pred_region
          _
        $region32: #{dqn_forward.1} parent=11 // pred_fallthru
          _
        // Predicated region
        $region33: #{dqn_forward.1} parent=11 // pred_check
          %p232 = pneg %p166
        $region34: #{dqn_forward.1} parent=11 // pred_check_branch
          %234 = sbr.rel (%p232) target = $region36
        $region35: #{dqn_forward.1} parent=11 // pred_region
          _
        $region36: #{dqn_forward.1} parent=11 // pred_fallthru
          _
      $region12: #{dqn_forward.1} parent=5 // pred_fallthru
        _
      %p235 = scmp.lt.s32.totalorder %s14, 2
      // Predicated region
      $region37: #{dqn_forward.1} parent=5 // pred_check
        %p236 = pneg %p235
      $region38: #{dqn_forward.1} parent=5 // pred_check_branch
        %238 = sbr.rel (%p236) target = $region40
      $region39: #{dqn_forward.1} parent=5 // pred_region
        // Predicated region
        $region41: #{dqn_forward.1} parent=39 // pred_check
          %p239 = pneg %p34
        $region42: #{dqn_forward.1} parent=39 // pred_check_branch
          %241 = sbr.rel (%p239) target = $region44
        $region43: #{dqn_forward.1} parent=39 // pred_region
          %s242 = smul.u32 3, %s14
          %p243 = scmp.lt.s32.totalorder %s242, 5
          %s244 = scalar_select %p243, %s242, 5
          %s245 = smul.addr %s244, 4
          %s246 = scalar_lea.vmem %s0, %s245
          %s247 = smul.u32 3, %s14
        $region44: #{dqn_forward.1} parent=39 // pred_fallthru
          _
      $region40: #{dqn_forward.1} parent=5 // pred_fallthru
        _
      %p248 = scmp.le.s32.totalorder 1, %s14
      %p249 = scmp.lt.s32.totalorder %s14, 3
      %p250 = pnand %p248, %p249
      %p251 = pneg %p250
      // Predicated region
      $region45: #{dqn_forward.1} parent=5 // pred_check
        _
      $region46: #{dqn_forward.1} parent=5 // pred_check_branch
        %253 = sbr.rel (%p250) target = $region48
      $region47: #{dqn_forward.1} parent=5 // pred_region
        %s254 = ssub.s32 %s14, 1
        // Predicated region
        $region49: #{dqn_forward.1} parent=47 // pred_check
          %p255 = pneg %p61
        $region50: #{dqn_forward.1} parent=47 // pred_check_branch
          %257 = sbr.rel (%p255) target = $region52
        $region51: #{dqn_forward.1} parent=47 // pred_region
          %258 = dma.done [#allocation3], 2048
        $region52: #{dqn_forward.1} parent=47 // pred_fallthru
          _
        %s259 = smul.u32 3, %s19
        %p260 = scmp.lt.s32.totalorder %s259, 5
        %s261 = scalar_select %p260, %s259, 5
        %s262 = smul.addr %s261, 4
        %s263 = scalar_lea.vmem %s0, %s262
        %p264 = pneg %p40
        %p265 = pneg %p37
        %p266 = pneg %p61
        %p267 = pneg %p58
        %p268 = pneg %p82
        %p269 = pneg %p79
        %p270 = pneg %p103
        %p271 = pneg %p100
        %p272 = pneg %p124
        %p273 = pneg %p121
        %p274 = pneg %p145
        %p275 = pneg %p142
        %p276 = pneg %p166
        %p277 = pneg %p163
        %p278 = pneg %p192
        %p279 = pneg %p189
        %s280 = smul.u32 3, %s19
        %p281 = scmp.lt.s32.totalorder %s280, 5
        %s282 = scalar_select %p281, %s280, 5
        %s283 = smul.addr %s282, 8
        %s284 = scalar_lea.vmem %s7, %s283
        %s285 = smul.u32 3, %s19
        %p286 = scmp.lt.s32.totalorder %s285, 5
        %s287 = scalar_select %p286, %s285, 5
        %s288 = smul.addr %s287, 4
        %s289 = scalar_lea.vmem %s0, %s288
        %s290 = smul.u32 3, %s19
        %s291 = smul.u32 3, %s19
        %p292 = scmp.lt.s32.totalorder %s291, 5
        %s293 = scalar_select %p292, %s291, 5
        %s294 = smul.addr %s293, 8
        %s295 = scalar_lea.vmem %s7, %s294
        %s296 = smul.u32 3, %s19
        %v298 = vld [vmem:[%s289] sm:$0xf]
        %v299 = vld [vmem:[%s289 + $0x4] sm:$0xf]
        %v300 = vld [vmem:[%s289 + $0x8] sm:$0xf]
        %v301 = vld [vmem:[#allocation2] sm:$0xff]
        %v302 = vld [vmem:[#allocation2 + $0x8] sm:$0xff]
        %v303 = vld [vmem:[#allocation2 + $0x10] sm:$0xff]
        %v304 = vld [vmem:[#allocation2 + $0x18] sm:$0xff]
        %v305 = vld [vmem:[#allocation2 + $0x20] sm:$0xff]
        %v306 = vld [vmem:[#allocation2 + $0x28] sm:$0xff]
        %v307 = vld [vmem:[#allocation2 + $0x30] sm:$0xff]
        %v308 = vld [vmem:[#allocation2 + $0x38] sm:$0xff]
        %v309 = vld [vmem:[#allocation2 + $0x40] sm:$0xff]
        %v310 = vld [vmem:[#allocation2 + $0x48] sm:$0xff]
        %v311 = vld [vmem:[#allocation2 + $0x50] sm:$0xff]
        %v312 = vld [vmem:[#allocation2 + $0x58] sm:$0xff]
        %v313 = vld [vmem:[#allocation2 + $0x60] sm:$0xff]
        %v314 = vld [vmem:[#allocation2 + $0x68] sm:$0xff]
        %v315 = vld [vmem:[#allocation2 + $0x70] sm:$0xff]
        %v316 = vld [vmem:[#allocation2 + $0x78] sm:$0xff]
        %v317 = vld [vmem:[%s2] sm:$0x3]
        %v319 = vlaneseq
        %v320 = vshrl.u32 %v319, 7
        %v321 = vsub.s32 0, %v320
        %v322 = vrot.slane %v317, %v321
        %v323 = vlaneseq
        %v324 = vshrl.u32 %v323, 7
        %v325 = vsub.s32 1, %v324
        %v326 = vrot.slane %v317, %v325
        %v332 = vunpack.c.l.b16 %v298
        %v333 = vunpack.c.l.b16 %v299
        %v334 = vunpack.c.l.b16 %v300
        %v335 = vpack.c.b16 %v333, %v332
        %v336 = vpack.c.b16 %v334, %v334
        %v355 = vunpack.c.l.b16 %v301
        %v356 = vunpack.c.h.b16 %v301
        %v357 = vunpack.c.l.b16 %v302
        %v358 = vunpack.c.h.b16 %v302
        %v359 = vunpack.c.l.b16 %v303
        %v360 = vunpack.c.h.b16 %v303
        %v361 = vunpack.c.l.b16 %v304
        %v362 = vunpack.c.h.b16 %v304
        %v363 = vunpack.c.l.b16 %v305
        %v364 = vunpack.c.h.b16 %v305
        %v365 = vunpack.c.l.b16 %v306
        %v366 = vunpack.c.h.b16 %v306
        %v367 = vunpack.c.l.b16 %v307
        %v368 = vunpack.c.h.b16 %v307
        %v369 = vunpack.c.l.b16 %v308
        %v370 = vunpack.c.h.b16 %v308
        %v371 = vunpack.c.l.b16 %v309
        %v372 = vunpack.c.h.b16 %v309
        %v373 = vunpack.c.l.b16 %v310
        %v374 = vunpack.c.h.b16 %v310
        %v375 = vunpack.c.l.b16 %v311
        %v376 = vunpack.c.h.b16 %v311
        %v377 = vunpack.c.l.b16 %v312
        %v378 = vunpack.c.h.b16 %v312
        %v379 = vunpack.c.l.b16 %v313
        %v380 = vunpack.c.h.b16 %v313
        %v381 = vunpack.c.l.b16 %v314
        %v382 = vunpack.c.h.b16 %v314
        %v383 = vunpack.c.l.b16 %v315
        %v384 = vunpack.c.h.b16 %v315
        %v385 = vunpack.c.l.b16 %v316
        %v386 = vunpack.c.h.b16 %v316
        %v387 = vpack.c.b16 %v357, %v355
        %v388 = vpack.c.b16 %v358, %v356
        %v389 = vpack.c.b16 %v361, %v359
        %v390 = vpack.c.b16 %v362, %v360
        %v391 = vpack.c.b16 %v365, %v363
        %v392 = vpack.c.b16 %v366, %v364
        %v393 = vpack.c.b16 %v369, %v367
        %v394 = vpack.c.b16 %v370, %v368
        %v395 = vpack.c.b16 %v373, %v371
        %v396 = vpack.c.b16 %v374, %v372
        %v397 = vpack.c.b16 %v377, %v375
        %v398 = vpack.c.b16 %v378, %v376
        %v399 = vpack.c.b16 %v381, %v379
        %v400 = vpack.c.b16 %v382, %v380
        %v401 = vpack.c.b16 %v385, %v383
        %v402 = vpack.c.b16 %v386, %v384
        %419 = vmatprep.subr.bf16.mxu0 %v402
        %420 = vmatpush1.bf16.msra.mxu0 %v401
        %421 = vmatprep.subr.bf16.mxu0 %v400
        %422 = vmatpush1.bf16.msra.mxu0 %v399
        %423 = vmatprep.subr.bf16.mxu0 %v398
        %424 = vmatpush1.bf16.msra.mxu0 %v397
        %425 = vmatprep.subr.bf16.mxu0 %v396
        %426 = vmatpush1.bf16.msra.mxu0 %v395
        %427 = vmatprep.subr.bf16.mxu0 %v394
        %428 = vmatpush1.bf16.msra.mxu0 %v393
        %429 = vmatprep.subr.bf16.mxu0 %v392
        %430 = vmatpush1.bf16.msra.mxu0 %v391
        %431 = vmatprep.subr.bf16.mxu0 %v390
        %432 = vmatpush1.bf16.msra.mxu0 %v389
        %433 = vmatprep.subr.bf16.mxu0 %v388
        %434 = vmatpush1.bf16.msra.mxu0 %v387
        %435 = vmatprep.subr.bf16.mxu0 0
        %436 = vmatpush2.bf16.msra.mxu0 0
        %437 = vmatprep.subr.bf16.mxu0 0
        %438 = vmatpush2.bf16.msra.mxu0 0
        %439 = vmatprep.subr.bf16.mxu0 0
        %440 = vmatpush2.bf16.msra.mxu0 0
        %441 = vmatprep.subr.bf16.mxu0 0
        %442 = vmatpush2.bf16.msra.mxu0 0
        %443 = vmatprep.subr.bf16.mxu0 0
        %444 = vmatpush2.bf16.msra.mxu0 0
        %445 = vmatprep.subr.bf16.mxu0 0
        %446 = vmatpush2.bf16.msra.mxu0 0
        %447 = vmatprep.subr.bf16.mxu0 0
        %448 = vmatpush2.bf16.msra.mxu0 0
        %449 = vmatprep.subr.bf16.mxu0 0
        %450 = vmatpush2.bf16.msra.mxu0 0
        %451 = vmatprep.mubr.bf16.mxu0 0
        %452 = vmatmul.mubr.bf16.gmra.mxu0 %v335
        %v453 = vpop.f32.mrf.mxu0
        %v454 = vadd.f32 %v322, %v453
        %v455 = vpop.f32.mrf.mxu0
        %v456 = vadd.f32 %v326, %v455
        %v457 = vpop.f32.mrf.mxu0
        %v458 = vadd.f32 %v322, %v457
        %v459 = vpop.f32.mrf.mxu0
        %v460 = vadd.f32 %v326, %v459
        %461 = vmatprep.mubr.bf16.mxu0 0
        %462 = vmatmul.mubr.bf16.gmra.mxu0 %v336
        %v463 = vpop.f32.mrf.mxu0
        %v464 = vadd.f32 %v322, %v463
        %v465 = vpop.f32.mrf.mxu0
        %v466 = vadd.f32 %v326, %v465
        %v467 = vpop.f32.mrf.mxu0
        %v468 = vpop.f32.mrf.mxu0
        %469 = vdwg.mxu0
        %v470 = vmax.f32 %v454, 0.0
        %v471 = vmax.f32 %v456, 0.0
        %v472 = vmax.f32 %v458, 0.0
        %v473 = vmax.f32 %v460, 0.0
        %v474 = vmax.f32 %v464, 0.0
        %v475 = vmax.f32 %v466, 0.0
        %v476 = vpack.c.bf16 %v472, %v470
        %v477 = vpack.c.bf16 %v473, %v471
        %v478 = vpack.c.bf16 %v474, %v474
        %v479 = vpack.c.bf16 %v475, %v475
        %v480 = vld [vmem:[%s3] sm:$0xff]
        %v481 = vld [vmem:[%s3 + $0x8] sm:$0xff]
        %v482 = vld [vmem:[%s3 + $0x10] sm:$0xff]
        %v483 = vld [vmem:[%s3 + $0x18] sm:$0xff]
        %v484 = vld [vmem:[%s3 + $0x20] sm:$0xff]
        %v485 = vld [vmem:[%s3 + $0x28] sm:$0xff]
        %v486 = vld [vmem:[%s3 + $0x30] sm:$0xff]
        %v487 = vld [vmem:[%s3 + $0x38] sm:$0xff]
        %v488 = vld [vmem:[%s3 + $0x40] sm:$0xff]
        %v489 = vld [vmem:[%s3 + $0x48] sm:$0xff]
        %v490 = vld [vmem:[%s3 + $0x50] sm:$0xff]
        %v491 = vld [vmem:[%s3 + $0x58] sm:$0xff]
        %v492 = vld [vmem:[%s3 + $0x60] sm:$0xff]
        %v493 = vld [vmem:[%s3 + $0x68] sm:$0xff]
        %v494 = vld [vmem:[%s3 + $0x70] sm:$0xff]
        %v495 = vld [vmem:[%s3 + $0x78] sm:$0xff]
        %v496 = vld [vmem:[%s3 + $0x80] sm:$0xff]
        %v497 = vld [vmem:[%s3 + $0x88] sm:$0xff]
        %v498 = vld [vmem:[%s3 + $0x90] sm:$0xff]
        %v499 = vld [vmem:[%s3 + $0x98] sm:$0xff]
        %v500 = vld [vmem:[%s3 + $0xa0] sm:$0xff]
        %v501 = vld [vmem:[%s3 + $0xa8] sm:$0xff]
        %v502 = vld [vmem:[%s3 + $0xb0] sm:$0xff]
        %v503 = vld [vmem:[%s3 + $0xb8] sm:$0xff]
        %v504 = vld [vmem:[%s3 + $0xc0] sm:$0xff]
        %v505 = vld [vmem:[%s3 + $0xc8] sm:$0xff]
        %v506 = vld [vmem:[%s3 + $0xd0] sm:$0xff]
        %v507 = vld [vmem:[%s3 + $0xd8] sm:$0xff]
        %v508 = vld [vmem:[%s3 + $0xe0] sm:$0xff]
        %v509 = vld [vmem:[%s3 + $0xe8] sm:$0xff]
        %v510 = vld [vmem:[%s3 + $0xf0] sm:$0xff]
        %v511 = vld [vmem:[%s3 + $0xf8] sm:$0xff]
        %v512 = vld [vmem:[%s4] sm:$0x3]
        %v514 = vlaneseq
        %v515 = vshrl.u32 %v514, 7
        %v516 = vsub.s32 0, %v515
        %v517 = vrot.slane %v512, %v516
        %v518 = vlaneseq
        %v519 = vshrl.u32 %v518, 7
        %v520 = vsub.s32 1, %v519
        %v521 = vrot.slane %v512, %v520
        %v556 = vunpack.c.l.b16 %v480
        %v557 = vunpack.c.h.b16 %v480
        %v558 = vunpack.c.l.b16 %v481
        %v559 = vunpack.c.h.b16 %v481
        %v560 = vunpack.c.l.b16 %v482
        %v561 = vunpack.c.h.b16 %v482
        %v562 = vunpack.c.l.b16 %v483
        %v563 = vunpack.c.h.b16 %v483
        %v564 = vunpack.c.l.b16 %v484
        %v565 = vunpack.c.h.b16 %v484
        %v566 = vunpack.c.l.b16 %v485
        %v567 = vunpack.c.h.b16 %v485
        %v568 = vunpack.c.l.b16 %v486
        %v569 = vunpack.c.h.b16 %v486
        %v570 = vunpack.c.l.b16 %v487
        %v571 = vunpack.c.h.b16 %v487
        %v572 = vunpack.c.l.b16 %v488
        %v573 = vunpack.c.h.b16 %v488
        %v574 = vunpack.c.l.b16 %v489
        %v575 = vunpack.c.h.b16 %v489
        %v576 = vunpack.c.l.b16 %v490
        %v577 = vunpack.c.h.b16 %v490
        %v578 = vunpack.c.l.b16 %v491
        %v579 = vunpack.c.h.b16 %v491
        %v580 = vunpack.c.l.b16 %v492
        %v581 = vunpack.c.h.b16 %v492
        %v582 = vunpack.c.l.b16 %v493
        %v583 = vunpack.c.h.b16 %v493
        %v584 = vunpack.c.l.b16 %v494
        %v585 = vunpack.c.h.b16 %v494
        %v586 = vunpack.c.l.b16 %v495
        %v587 = vunpack.c.h.b16 %v495
        %v588 = vunpack.c.l.b16 %v496
        %v589 = vunpack.c.h.b16 %v496
        %v590 = vunpack.c.l.b16 %v497
        %v591 = vunpack.c.h.b16 %v497
        %v592 = vunpack.c.l.b16 %v498
        %v593 = vunpack.c.h.b16 %v498
        %v594 = vunpack.c.l.b16 %v499
        %v595 = vunpack.c.h.b16 %v499
        %v596 = vunpack.c.l.b16 %v500
        %v597 = vunpack.c.h.b16 %v500
        %v598 = vunpack.c.l.b16 %v501
        %v599 = vunpack.c.h.b16 %v501
        %v600 = vunpack.c.l.b16 %v502
        %v601 = vunpack.c.h.b16 %v502
        %v602 = vunpack.c.l.b16 %v503
        %v603 = vunpack.c.h.b16 %v503
        %v604 = vunpack.c.l.b16 %v504
        %v605 = vunpack.c.h.b16 %v504
        %v606 = vunpack.c.l.b16 %v505
        %v607 = vunpack.c.h.b16 %v505
        %v608 = vunpack.c.l.b16 %v506
        %v609 = vunpack.c.h.b16 %v506
        %v610 = vunpack.c.l.b16 %v507
        %v611 = vunpack.c.h.b16 %v507
        %v612 = vunpack.c.l.b16 %v508
        %v613 = vunpack.c.h.b16 %v508
        %v614 = vunpack.c.l.b16 %v509
        %v615 = vunpack.c.h.b16 %v509
        %v616 = vunpack.c.l.b16 %v510
        %v617 = vunpack.c.h.b16 %v510
        %v618 = vunpack.c.l.b16 %v511
        %v619 = vunpack.c.h.b16 %v511
        %v620 = vpack.c.b16 %v558, %v556
        %v621 = vpack.c.b16 %v559, %v557
        %v622 = vpack.c.b16 %v562, %v560
        %v623 = vpack.c.b16 %v563, %v561
        %v624 = vpack.c.b16 %v566, %v564
        %v625 = vpack.c.b16 %v567, %v565
        %v626 = vpack.c.b16 %v570, %v568
        %v627 = vpack.c.b16 %v571, %v569
        %v628 = vpack.c.b16 %v574, %v572
        %v629 = vpack.c.b16 %v575, %v573
        %v630 = vpack.c.b16 %v578, %v576
        %v631 = vpack.c.b16 %v579, %v577
        %v632 = vpack.c.b16 %v582, %v580
        %v633 = vpack.c.b16 %v583, %v581
        %v634 = vpack.c.b16 %v586, %v584
        %v635 = vpack.c.b16 %v587, %v585
        %v636 = vpack.c.b16 %v590, %v588
        %v637 = vpack.c.b16 %v591, %v589
        %v638 = vpack.c.b16 %v594, %v592
        %v639 = vpack.c.b16 %v595, %v593
        %v640 = vpack.c.b16 %v598, %v596
        %v641 = vpack.c.b16 %v599, %v597
        %v642 = vpack.c.b16 %v602, %v600
        %v643 = vpack.c.b16 %v603, %v601
        %v644 = vpack.c.b16 %v606, %v604
        %v645 = vpack.c.b16 %v607, %v605
        %v646 = vpack.c.b16 %v610, %v608
        %v647 = vpack.c.b16 %v611, %v609
        %v648 = vpack.c.b16 %v614, %v612
        %v649 = vpack.c.b16 %v615, %v613
        %v650 = vpack.c.b16 %v618, %v616
        %v651 = vpack.c.b16 %v619, %v617
        %684 = vmatprep.subr.bf16.mxu0 %v635
        %685 = vmatpush1.bf16.msra.mxu0 %v634
        %686 = vmatprep.subr.bf16.mxu0 %v633
        %687 = vmatpush1.bf16.msra.mxu0 %v632
        %688 = vmatprep.subr.bf16.mxu0 %v631
        %689 = vmatpush1.bf16.msra.mxu0 %v630
        %690 = vmatprep.subr.bf16.mxu0 %v629
        %691 = vmatpush1.bf16.msra.mxu0 %v628
        %692 = vmatprep.subr.bf16.mxu0 %v627
        %693 = vmatpush1.bf16.msra.mxu0 %v626
        %694 = vmatprep.subr.bf16.mxu0 %v625
        %695 = vmatpush1.bf16.msra.mxu0 %v624
        %696 = vmatprep.subr.bf16.mxu0 %v623
        %697 = vmatpush1.bf16.msra.mxu0 %v622
        %698 = vmatprep.subr.bf16.mxu0 %v621
        %699 = vmatpush1.bf16.msra.mxu0 %v620
        %700 = vmatprep.subr.bf16.mxu0 %v651
        %701 = vmatpush2.bf16.msra.mxu0 %v650
        %702 = vmatprep.subr.bf16.mxu0 %v649
        %703 = vmatpush2.bf16.msra.mxu0 %v648
        %704 = vmatprep.subr.bf16.mxu0 %v647
        %705 = vmatpush2.bf16.msra.mxu0 %v646
        %706 = vmatprep.subr.bf16.mxu0 %v645
        %707 = vmatpush2.bf16.msra.mxu0 %v644
        %708 = vmatprep.subr.bf16.mxu0 %v643
        %709 = vmatpush2.bf16.msra.mxu0 %v642
        %710 = vmatprep.subr.bf16.mxu0 %v641
        %711 = vmatpush2.bf16.msra.mxu0 %v640
        %712 = vmatprep.subr.bf16.mxu0 %v639
        %713 = vmatpush2.bf16.msra.mxu0 %v638
        %714 = vmatprep.subr.bf16.mxu0 %v637
        %715 = vmatpush2.bf16.msra.mxu0 %v636
        %716 = vmatprep.mubr.bf16.mxu0 %v477
        %717 = vmatmul.mubr.bf16.gmra.mxu0 %v476
        %v718 = vpop.f32.mrf.mxu0
        %v719 = vadd.f32 %v517, %v718
        %v720 = vpop.f32.mrf.mxu0
        %v721 = vadd.f32 %v521, %v720
        %v722 = vpop.f32.mrf.mxu0
        %v723 = vadd.f32 %v517, %v722
        %v724 = vpop.f32.mrf.mxu0
        %v725 = vadd.f32 %v521, %v724
        %726 = vmatprep.mubr.bf16.mxu0 %v479
        %727 = vmatmul.mubr.bf16.gmra.mxu0 %v478
        %v728 = vpop.f32.mrf.mxu0
        %v729 = vadd.f32 %v517, %v728
        %v730 = vpop.f32.mrf.mxu0
        %v731 = vadd.f32 %v521, %v730
        %v732 = vpop.f32.mrf.mxu0
        %v733 = vpop.f32.mrf.mxu0
        %734 = vdwg.mxu0
        %v735 = vmax.f32 %v719, 0.0
        %v736 = vmax.f32 %v721, 0.0
        %v737 = vmax.f32 %v723, 0.0
        %v738 = vmax.f32 %v725, 0.0
        %v739 = vmax.f32 %v729, 0.0
        %v740 = vmax.f32 %v731, 0.0
        %v741 = vpack.c.bf16 %v737, %v735
        %v742 = vpack.c.bf16 %v738, %v736
        %v743 = vpack.c.bf16 %v739, %v739
        %v744 = vpack.c.bf16 %v740, %v740
        %v745 = vld [vmem:[%s5] sm:$0xf]
        %v746 = vld [vmem:[%s5 + $0x4] sm:$0xf]
        %v747 = vld [vmem:[%s5 + $0x8] sm:$0xf]
        %v748 = vld [vmem:[%s5 + $0xc] sm:$0xf]
        %v749 = vld [vmem:[%s5 + $0x10] sm:$0xf]
        %v750 = vld [vmem:[%s5 + $0x14] sm:$0xf]
        %v751 = vld [vmem:[%s5 + $0x18] sm:$0xf]
        %v752 = vld [vmem:[%s5 + $0x1c] sm:$0xf]
        %v753 = vld [vmem:[%s5 + $0x20] sm:$0xf]
        %v754 = vld [vmem:[%s5 + $0x24] sm:$0xf]
        %v755 = vld [vmem:[%s5 + $0x28] sm:$0xf]
        %v756 = vld [vmem:[%s5 + $0x2c] sm:$0xf]
        %v757 = vld [vmem:[%s5 + $0x30] sm:$0xf]
        %v758 = vld [vmem:[%s5 + $0x34] sm:$0xf]
        %v759 = vld [vmem:[%s5 + $0x38] sm:$0xf]
        %v760 = vld [vmem:[%s5 + $0x3c] sm:$0xf]
        %v761 = vld [vmem:[%s5 + $0x40] sm:$0xf]
        %v762 = vld [vmem:[%s5 + $0x44] sm:$0xf]
        %v763 = vld [vmem:[%s5 + $0x48] sm:$0xf]
        %v764 = vld [vmem:[%s5 + $0x4c] sm:$0xf]
        %v765 = vld [vmem:[%s5 + $0x50] sm:$0xf]
        %v766 = vld [vmem:[%s5 + $0x54] sm:$0xf]
        %v767 = vld [vmem:[%s5 + $0x58] sm:$0xf]
        %v768 = vld [vmem:[%s5 + $0x5c] sm:$0xf]
        %v769 = vld [vmem:[%s5 + $0x60] sm:$0xf]
        %v770 = vld [vmem:[%s5 + $0x64] sm:$0xf]
        %v771 = vld [vmem:[%s5 + $0x68] sm:$0xf]
        %v772 = vld [vmem:[%s5 + $0x6c] sm:$0xf]
        %v773 = vld [vmem:[%s5 + $0x70] sm:$0xf]
        %v774 = vld [vmem:[%s5 + $0x74] sm:$0xf]
        %v775 = vld [vmem:[%s5 + $0x78] sm:$0xf]
        %v776 = vld [vmem:[%s5 + $0x7c] sm:$0xf]
        %v777 = vld [vmem:[%s6] sm:$0x1]
        %v779 = vlaneseq
        %v780 = vshrl.u32 %v779, 7
        %v781 = vsub.s32 0, %v780
        %v782 = vrot.slane %v777, %v781
        %v816 = vunpack.c.l.b16 %v745
        %v817 = vunpack.c.l.b16 %v746
        %v818 = vunpack.c.l.b16 %v747
        %v819 = vunpack.c.l.b16 %v748
        %v820 = vunpack.c.l.b16 %v749
        %v821 = vunpack.c.l.b16 %v750
        %v822 = vunpack.c.l.b16 %v751
        %v823 = vunpack.c.l.b16 %v752
        %v824 = vunpack.c.l.b16 %v753
        %v825 = vunpack.c.l.b16 %v754
        %v826 = vunpack.c.l.b16 %v755
        %v827 = vunpack.c.l.b16 %v756
        %v828 = vunpack.c.l.b16 %v757
        %v829 = vunpack.c.l.b16 %v758
        %v830 = vunpack.c.l.b16 %v759
        %v831 = vunpack.c.l.b16 %v760
        %v832 = vunpack.c.l.b16 %v761
        %v833 = vunpack.c.l.b16 %v762
        %v834 = vunpack.c.l.b16 %v763
        %v835 = vunpack.c.l.b16 %v764
        %v836 = vunpack.c.l.b16 %v765
        %v837 = vunpack.c.l.b16 %v766
        %v838 = vunpack.c.l.b16 %v767
        %v839 = vunpack.c.l.b16 %v768
        %v840 = vunpack.c.l.b16 %v769
        %v841 = vunpack.c.l.b16 %v770
        %v842 = vunpack.c.l.b16 %v771
        %v843 = vunpack.c.l.b16 %v772
        %v844 = vunpack.c.l.b16 %v773
        %v845 = vunpack.c.l.b16 %v774
        %v846 = vunpack.c.l.b16 %v775
        %v847 = vunpack.c.l.b16 %v776
        %v848 = vpack.c.b16 %v817, %v816
        %v849 = vpack.c.b16 %v819, %v818
        %v850 = vpack.c.b16 %v821, %v820
        %v851 = vpack.c.b16 %v823, %v822
        %v852 = vpack.c.b16 %v825, %v824
        %v853 = vpack.c.b16 %v827, %v826
        %v854 = vpack.c.b16 %v829, %v828
        %v855 = vpack.c.b16 %v831, %v830
        %v856 = vpack.c.b16 %v833, %v832
        %v857 = vpack.c.b16 %v835, %v834
        %v858 = vpack.c.b16 %v837, %v836
        %v859 = vpack.c.b16 %v839, %v838
        %v860 = vpack.c.b16 %v841, %v840
        %v861 = vpack.c.b16 %v843, %v842
        %v862 = vpack.c.b16 %v845, %v844
        %v863 = vpack.c.b16 %v847, %v846
        %880 = vmatprep.subr.bf16.mxu0 0
        %881 = vmatpush1.bf16.msra.mxu0 %v855
        %882 = vmatprep.subr.bf16.mxu0 0
        %883 = vmatpush1.bf16.msra.mxu0 %v854
        %884 = vmatprep.subr.bf16.mxu0 0
        %885 = vmatpush1.bf16.msra.mxu0 %v853
        %886 = vmatprep.subr.bf16.mxu0 0
        %887 = vmatpush1.bf16.msra.mxu0 %v852
        %888 = vmatprep.subr.bf16.mxu0 0
        %889 = vmatpush1.bf16.msra.mxu0 %v851
        %890 = vmatprep.subr.bf16.mxu0 0
        %891 = vmatpush1.bf16.msra.mxu0 %v850
        %892 = vmatprep.subr.bf16.mxu0 0
        %893 = vmatpush1.bf16.msra.mxu0 %v849
        %894 = vmatprep.subr.bf16.mxu0 0
        %895 = vmatpush1.bf16.msra.mxu0 %v848
        %896 = vmatprep.subr.bf16.mxu0 0
        %897 = vmatpush2.bf16.msra.mxu0 %v863
        %898 = vmatprep.subr.bf16.mxu0 0
        %899 = vmatpush2.bf16.msra.mxu0 %v862
        %900 = vmatprep.subr.bf16.mxu0 0
        %901 = vmatpush2.bf16.msra.mxu0 %v861
        %902 = vmatprep.subr.bf16.mxu0 0
        %903 = vmatpush2.bf16.msra.mxu0 %v860
        %904 = vmatprep.subr.bf16.mxu0 0
        %905 = vmatpush2.bf16.msra.mxu0 %v859
        %906 = vmatprep.subr.bf16.mxu0 0
        %907 = vmatpush2.bf16.msra.mxu0 %v858
        %908 = vmatprep.subr.bf16.mxu0 0
        %909 = vmatpush2.bf16.msra.mxu0 %v857
        %910 = vmatprep.subr.bf16.mxu0 0
        %911 = vmatpush2.bf16.msra.mxu0 %v856
        %912 = vmatprep.mubr.bf16.mxu0 %v742
        %913 = vmatmul.mubr.bf16.gmra.mxu0 %v741
        %v914 = vpop.f32.mrf.mxu0
        %v915 = vadd.f32 %v782, %v914
        %v916 = vpop.f32.mrf.mxu0
        %v917 = vpop.f32.mrf.mxu0
        %v918 = vadd.f32 %v782, %v917
        %v919 = vpop.f32.mrf.mxu0
        %920 = vmatprep.mubr.bf16.mxu0 %v744
        %921 = vmatmul.mubr.bf16.gmra.mxu0 %v743
        %v922 = vpop.f32.mrf.mxu0
        %v923 = vadd.f32 %v782, %v922
        %v924 = vpop.f32.mrf.mxu0
        %v925 = vpop.f32.mrf.mxu0
        %v926 = vpop.f32.mrf.mxu0
        %927 = vdwg.mxu0
        %vm928 = vcmask 523264
        %929 = vst.msk [vmem:[%s295] sm:$0xff] %vm928, %v915
        %930 = vst.msk [vmem:[%s295 + $0x8] sm:$0xff] %vm928, %v918
        %931 = vst.msk [vmem:[%s295 + $0x10] sm:$0xff] %vm928, %v923
        %s932 = smul.u32 3, %s19
        %p933 = scmp.lt.s32.totalorder %s932, 5
        %s934 = scalar_select %p933, %s932, 5
        %s935 = smul.addr %s934, 8
        %s936 = scalar_lea.vmem %s7, %s935
        // Predicated region
        $region53: #{dqn_forward.1} parent=47 // pred_check
          %p937 = pneg %p189
        $region54: #{dqn_forward.1} parent=47 // pred_check_branch
          %939 = sbr.rel (%p937) target = $region56
        $region55: #{dqn_forward.1} parent=47 // pred_region
          %s940 = smul.u32 3, %s19
        $region56: #{dqn_forward.1} parent=47 // pred_fallthru
          _
      $region48: #{dqn_forward.1} parent=5 // pred_fallthru
        _
      %p941 = scmp.le.s32.totalorder 2, %s14
      // Predicated region
      $region57: #{dqn_forward.1} parent=5 // pred_check
        %p942 = pneg %p941
      $region58: #{dqn_forward.1} parent=5 // pred_check_branch
        %944 = sbr.rel (%p942) target = $region60
      $region59: #{dqn_forward.1} parent=5 // pred_region
        %s945 = ssub.s32 %s14, 2
        // Predicated region
        $region61: #{dqn_forward.1} parent=59 // pred_check
          %p946 = pneg %p195
        $region62: #{dqn_forward.1} parent=59 // pred_check_branch
          %948 = sbr.rel (%p946) target = $region64
        $region63: #{dqn_forward.1} parent=59 // pred_region
          %s949 = smul.u32 3, %s20
          %p950 = scmp.lt.s32.totalorder %s949, 5
          %s951 = scalar_select %p950, %s949, 5
          %s952 = smul.addr %s951, 8
          %s953 = scalar_lea.vmem %s7, %s952
        $region64: #{dqn_forward.1} parent=59 // pred_fallthru
          _
      $region60: #{dqn_forward.1} parent=5 // pred_fallthru
        _
    $region6: #{dqn_forward.1} parent=1 // loop_footer
      %s18 = sadd.s32 1, %s14
    $region7: #{dqn_forward.1} parent=1 // loop_footer_branch
      %13 = sbr.rel target = $region3
    $region8: #{dqn_forward.1} parent=1 // loop_exit
      _
    %954 = vsyncpa [#allocation3], 1
    %s955 = scalar_lea.sflag [#allocation3], 1
    %956 = vsyncpa %s955, 1

</llo_original>
